<compile_context>
chip_gen: v5e
topology: v5e:2x2
jax: 0.10.0
libtpu: 0.0.40
codegen_flags: <defaults>
</compile_context>

<pallas_src>
import numpy as np
import jax
import jax.numpy as jnp
from jax.experimental import pallas as pl
from jax.experimental.pallas import tpu as pltpu

# ---- static sizes ----------------------------------------------------------------------
B = 2          # batch
L = 512        # input length (Conv s=2 twice -> 128, ConvTranspose s=2 twice -> 512)
N = L // 4     # 128 = one lane span per batch block
BN = B * N     # 256 lanes inside the kernel

C1 = 16        # encoder conv1 out channels
C2 = 32        # encoder conv2 out channels


# ================================= fused kernel ==========================================
def autoencoder_kernel(xp_ref, wpack_ref, vpack_ref, out_ref):
    f32 = jnp.float32

    # lane masks for the per-batch-block boundaries (computed once, broadcast in where)
    lane = jax.lax.broadcasted_iota(jnp.int32, (1, BN), 1)
    is_first = (lane % N) == 0          # first lane of each batch block
    is_last = (lane % N) == (N - 1)     # last lane of each batch block

    def shift_right(v):  # result[:, l] = v[:, l-1], zero at block start (conv zero-pad)
        return jnp.where(is_first, 0.0, pltpu.roll(v, shift=1, axis=1))

    def shift_left(v):   # result[:, l] = v[:, l+1], zero at block end
        return jnp.where(is_last, 0.0, pltpu.roll(v, shift=BN - 1, axis=1))

    # input phases: xp[p, b*N + n] = x[b, 0, 4n + p]
    x0 = xp_ref[0:1, :]
    x1 = xp_ref[1:2, :]
    x2 = xp_ref[2:3, :]
    x3 = xp_ref[3:4, :]

    # small packed weights/biases (static slices of the two packed VMEM inputs)
    w1c0 = vpack_ref[0:C1, 0:1]          # (16, 1) per-tap columns of Conv1d(1->16)
    w1c1 = vpack_ref[0:C1, 1:2]
    w1c2 = vpack_ref[0:C1, 2:3]
    b1 = vpack_ref[0:C1, 3:4]            # (16, 1)
    b2 = vpack_ref[0:C2, 4:5]            # (32, 1)
    b3s = vpack_ref[0:C2, 5:6]           # (32, 1) = [b3; b3]
    b4 = vpack_ref[0:1, 6:7]             # (1, 1)

    # ---- layer 1: Conv1d(1->16, k=3, s=2, p=1) + ReLU  (VPU broadcast-FMA, K=1) --------
    # h1_0[n] = relu(w1[0]*x[4n-1] + w1[1]*x[4n] + w1[2]*x[4n+1] + b1)
    #   (shift_right(w1c0 * x3) == w1c0 * shift_right(x3); keeps the roll on a (16, BN) op)
    # h1_1[n] = relu(w1[0]*x[4n+1] + w1[1]*x[4n+2] + w1[2]*x[4n+3] + b1)
    h1_0 = jnp.maximum(shift_right(w1c0 * x3) + w1c1 * x0 + w1c2 * x1 + b1, 0.0)
    h1_1 = jnp.maximum(w1c0 * x1 + w1c1 * x2 + w1c2 * x3 + b1, 0.0)

    # ---- layer 2: Conv1d(16->32, k=3, s=2, p=1) + ReLU — one K=48 MXU matmul ------------
    h1_1s = shift_right(h1_1)                                       # h1[., 2m-1] phase
    h1_stack = jnp.concatenate([h1_1s, h1_0, h1_1], axis=0)         # (48, BN)
    h2 = jnp.maximum(
        jnp.dot(wpack_ref[0:C2, 0:3 * C1], h1_stack, preferred_element_type=f32) + b2,
        0.0)                                                         # (32, BN)

    # ---- layer 3: ConvTranspose1d(32->16, k=3, s=2, p=1, op=1) + ReLU — one K=64 matmul -
    h2s = shift_left(h2)                                             # h2[., m+1]
    h2_stack = jnp.concatenate([h2, h2s], axis=0)                    # (64, BN)
    h3 = jnp.maximum(
        jnp.dot(wpack_ref[C2:2 * C2, 0:2 * C2], h2_stack, preferred_element_type=f32)
        + b3s, 0.0)                                                  # (32, BN) = [h3_0; h3_1]

    # ---- layer 4: ConvTranspose1d(16->1, k=3, s=2, p=1, op=1) — one K=48 matmul ---------
    h3_0s = shift_left(h3[0:C1, :])                                  # h3_0[., n+1]
    h3_stack = jnp.concatenate([h3, h3_0s], axis=0)                  # (48, BN)
    # all four output phases in one lane-dense store
    out_ref[...] = (
        jnp.dot(wpack_ref[2 * C2:2 * C2 + 4, 0:3 * C1], h3_stack,
                preferred_element_type=f32) + b4)


# ================================== wrapper ==============================================
def forward(x, P):
    bsz, _, length = x.shape
    n = length // 4
    assert bsz == B and length == L
    # phase split (glue): xp[p, b*n + m] = x[b, 0, 4m + p]
    xp = x.reshape(bsz, n, 4).transpose(2, 0, 1).reshape(4, bsz * n)
    out = pl.pallas_call(
        autoencoder_kernel,
        out_shape=jax.ShapeDtypeStruct((4, bsz * n), jnp.float32),
        in_specs=[pl.BlockSpec(memory_space=pltpu.MemorySpace.VMEM)] * 3,
        out_specs=pl.BlockSpec(memory_space=pltpu.MemorySpace.VMEM),
    )(xp, P["wpack"], P["vpack"])
    # phase interleave (glue): y[b, 0, 4m + p] = out[p, b*n + m]
    return out.reshape(4, bsz, n).transpose(1, 2, 0).reshape(bsz, 1, length)


def pack_params(T):
    """Host-side (one-time) repack of torch-layout params into two VMEM inputs."""
    f32 = jnp.float32

    # Conv1d(1->16): (out,in,k) -> (16, 3) per-tap columns
    w1m = T["w1"][:, 0, :].astype(f32)                               # (16, 3)

    # Conv1d(16->32): K-stacked over [h1_1s; h1_0; h1_1]
    w2 = T["w2"].astype(f32)                                          # (32, 16, 3)
    W2s = jnp.concatenate([w2[:, :, 0], w2[:, :, 1], w2[:, :, 2]], axis=1)   # (32, 48)

    # ConvTranspose1d(32->16): (in,out,k); per-tap out x in matrices are w3[:, :, k].T
    w3t = [T["w3"][:, :, k].T.astype(f32) for k in range(3)]          # (16, 32) each
    z = jnp.zeros((C1, C2), f32)
    W3s = jnp.concatenate(
        [jnp.concatenate([w3t[1], z], axis=1),          # rows 0..15  -> h3_0
         jnp.concatenate([w3t[2], w3t[0]], axis=1)],    # rows 16..31 -> h3_1
        axis=0)                                                      # (32, 64)

    # ConvTranspose1d(16->1): K-stacked over [h3_0; h3_1; h3_0s] -> 4 output phases
    w4t = [T["w4"][:, :, k].T.astype(f32) for k in range(3)]          # (1, 16) each
    z1 = jnp.zeros((1, C1), f32)
    W4s = jnp.concatenate(
        [jnp.concatenate([w4t[1], z1, z1], axis=1),      # y0
         jnp.concatenate([w4t[2], w4t[0], z1], axis=1),  # y1
         jnp.concatenate([z1, w4t[1], z1], axis=1),      # y2
         jnp.concatenate([z1, w4t[2], w4t[0]], axis=1)], # y3
        axis=0)                                                      # (4, 48)

    wpack = jnp.zeros((2 * C2 + 4, 2 * C2), f32)                     # (68, 64)
    wpack = wpack.at[0:C2, 0:3 * C1].set(W2s)
    wpack = wpack.at[C2:2 * C2, 0:2 * C2].set(W3s)
    wpack = wpack.at[2 * C2:2 * C2 + 4, 0:3 * C1].set(W4s)

    vpack = jnp.zeros((C2, 8), f32)                                  # (32, 8)
    vpack = vpack.at[0:C1, 0:3].set(w1m)
    vpack = vpack.at[0:C1, 3].set(T["b1"].astype(f32))
    vpack = vpack.at[0:C2, 4].set(T["b2"].astype(f32))
    vpack = vpack.at[0:C1, 5].set(T["b3"].astype(f32))
    vpack = vpack.at[C1:C2, 5].set(T["b3"].astype(f32))
    vpack = vpack.at[0, 6].set(T["b4"].astype(f32)[0])

    return {"wpack": wpack, "vpack": vpack}


# ============================== reference (pure JAX) =====================================
def conv1d_ref(x, w, b, stride, padding):
    _, _, lin = x.shape
    cout, _, k = w.shape
    lout = (lin + 2 * padding - k) // stride + 1
    xp = jnp.pad(x, ((0, 0), (0, 0), (padding, padding)))
    patches = jnp.stack(
        [xp[:, :, i:i + stride * (lout - 1) + 1:stride] for i in range(k)], axis=-1)
    return jnp.einsum("bclk,ock->bol", patches, w) + b[None, :, None]


def conv_transpose1d_ref(x, w, b, stride, padding, output_padding):
    bsz, cin, lin = x.shape
    _, cout, k = w.shape
    lout = (lin - 1) * stride - 2 * padding + k + output_padding
    buf_len = max((lin - 1) * stride + k, padding + lout)
    buf = jnp.zeros((bsz, cout, buf_len), x.dtype)
    for kk in range(k):
        contrib = jnp.einsum("bcs,co->bos", x, w[:, :, kk])          # (B, Cout, Lin)
        buf = buf.at[:, :, kk:kk + stride * (lin - 1) + 1:stride].add(contrib)
    return buf[:, :, padding:padding + lout] + b[None, :, None]


def reference(x, T):
    h = jax.nn.relu(conv1d_ref(x, T["w1"], T["b1"], 2, 1))
    h = jax.nn.relu(conv1d_ref(h, T["w2"], T["b2"], 2, 1))
    h = jax.nn.relu(conv_transpose1d_ref(h, T["w3"], T["b3"], 2, 1, 1))
    return conv_transpose1d_ref(h, T["w4"], T["b4"], 2, 1, 1)


# ====================================== main =============================================
if __name__ == "__main__":
    key = jax.random.PRNGKey(0)
    ks = jax.random.split(key, 9)

    def uinit(k, shape, fan_in):
        bound = 1.0 / np.sqrt(fan_in)
        return jax.random.uniform(k, shape, jnp.float32, -bound, bound)

    # torch-layout parameters (deterministic synthetic init)
    T = {
        "w1": uinit(ks[0], (C1, 1, 3), 3),        # Conv1d(1,16)            (out,in,k)
        "b1": uinit(ks[1], (C1,), 3),
        "w2": uinit(ks[2], (C2, C1, 3), C1 * 3),  # Conv1d(16,32)           (out,in,k)
        "b2": uinit(ks[3], (C2,), C1 * 3),
        "w3": uinit(ks[4], (C2, C1, 3), C2 * 3),  # ConvTranspose1d(32,16)  (in,out,k)
        "b3": uinit(ks[5], (C1,), C2 * 3),
        "w4": uinit(ks[6], (C1, 1, 3), C1 * 3),   # ConvTranspose1d(16,1)   (in,out,k)
        "b4": uinit(ks[7], (1,), C1 * 3),
    }

    P = jax.tree_util.tree_map(lambda a: a, pack_params(T))

    x = jax.random.normal(ks[8], (B, 1, L), jnp.float32)

    out = jax.jit(forward)(x, P)
    out = jax.block_until_ready(out)

    ref = reference(x, T)
    assert out.shape == (B, 1, L)
    np.testing.assert_allclose(np.asarray(out), np.asarray(ref), rtol=5e-3, atol=5e-3)

    print("KERNEL_OK")
</pallas_src>

<mosaic_0001>
module attributes {stable_mosaic.version = 11 : i64} {
  func.func @autoencoder_kernel(%arg0: memref<4x256xf32, #tpu.memory_space<vmem>>, %arg1: memref<68x64xf32, #tpu.memory_space<vmem>>, %arg2: memref<32x8xf32, #tpu.memory_space<vmem>>, %arg3: memref<4x256xf32, #tpu.memory_space<vmem>>) attributes {dimension_semantics = [], scalar_prefetch = 0 : i64, scratch_operands = 0 : i64, tpu.core_type = #tpu.core_type<tc>} {
    %0 = tpu.iota {dimensions = array<i32: 1>} : vector<1x256xi32>
    %c128_i32 = arith.constant 128 : i32
    %c0_i32 = arith.constant 0 : i32
    %1 = arith.cmpi eq, %c128_i32, %c0_i32 : i32
    %c1_i32 = arith.constant 1 : i32
    %2 = arith.select %1, %c1_i32, %c128_i32 : i32
    %3 = vector.broadcast %2 : i32 to vector<1x256xi32>
    %4 = arith.remsi %0, %3 : vector<1x256xi32>
    %c0_i32_0 = arith.constant 0 : i32
    %5 = vector.broadcast %c0_i32_0 : i32 to vector<1x256xi32>
    %6 = arith.cmpi ne, %4, %5 : vector<1x256xi32>
    %c0_i32_1 = arith.constant 0 : i32
    %7 = vector.broadcast %c0_i32_1 : i32 to vector<1x256xi32>
    %8 = arith.cmpi slt, %4, %7 : vector<1x256xi32>
    %c0_i32_2 = arith.constant 0 : i32
    %9 = arith.cmpi slt, %2, %c0_i32_2 : i32
    %10 = vector.broadcast %9 : i1 to vector<1x256xi1>
    %11 = vector.broadcast %10 : vector<1x256xi1> to vector<1x256xi1>
    %12 = arith.xori %8, %11 : vector<1x256xi1>
    %13 = arith.andi %12, %6 : vector<1x256xi1>
    %14 = vector.broadcast %2 : i32 to vector<1x256xi32>
    %15 = arith.addi %4, %14 : vector<1x256xi32>
    %16 = arith.select %13, %15, %4 : vector<1x256xi1>, vector<1x256xi32>
    %c0_i32_3 = arith.constant 0 : i32
    %17 = vector.broadcast %c0_i32_3 : i32 to vector<1x256xi32>
    %18 = arith.cmpi eq, %16, %17 : vector<1x256xi32>
    %c128_i32_4 = arith.constant 128 : i32
    %c0_i32_5 = arith.constant 0 : i32
    %19 = arith.cmpi eq, %c128_i32_4, %c0_i32_5 : i32
    %c1_i32_6 = arith.constant 1 : i32
    %20 = arith.select %19, %c1_i32_6, %c128_i32_4 : i32
    %21 = vector.broadcast %20 : i32 to vector<1x256xi32>
    %22 = arith.remsi %0, %21 : vector<1x256xi32>
    %c0_i32_7 = arith.constant 0 : i32
    %23 = vector.broadcast %c0_i32_7 : i32 to vector<1x256xi32>
    %24 = arith.cmpi ne, %22, %23 : vector<1x256xi32>
    %c0_i32_8 = arith.constant 0 : i32
    %25 = vector.broadcast %c0_i32_8 : i32 to vector<1x256xi32>
    %26 = arith.cmpi slt, %22, %25 : vector<1x256xi32>
    %c0_i32_9 = arith.constant 0 : i32
    %27 = arith.cmpi slt, %20, %c0_i32_9 : i32
    %28 = vector.broadcast %27 : i1 to vector<1x256xi1>
    %29 = vector.broadcast %28 : vector<1x256xi1> to vector<1x256xi1>
    %30 = arith.xori %26, %29 : vector<1x256xi1>
    %31 = arith.andi %30, %24 : vector<1x256xi1>
    %32 = vector.broadcast %20 : i32 to vector<1x256xi32>
    %33 = arith.addi %22, %32 : vector<1x256xi32>
    %34 = arith.select %31, %33, %22 : vector<1x256xi1>, vector<1x256xi32>
    %c127_i32 = arith.constant 127 : i32
    %35 = vector.broadcast %c127_i32 : i32 to vector<1x256xi32>
    %36 = arith.cmpi eq, %34, %35 : vector<1x256xi32>
    %c0 = arith.constant 0 : index
    %c0_10 = arith.constant 0 : index
    %37 = vector.load %arg0[%c0, %c0_10] : memref<4x256xf32, #tpu.memory_space<vmem>>, vector<1x256xf32>
    %c1 = arith.constant 1 : index
    %c0_11 = arith.constant 0 : index
    %38 = vector.load %arg0[%c1, %c0_11] : memref<4x256xf32, #tpu.memory_space<vmem>>, vector<1x256xf32>
    %c2 = arith.constant 2 : index
    %c0_12 = arith.constant 0 : index
    %39 = vector.load %arg0[%c2, %c0_12] : memref<4x256xf32, #tpu.memory_space<vmem>>, vector<1x256xf32>
    %c3 = arith.constant 3 : index
    %c0_13 = arith.constant 0 : index
    %40 = vector.load %arg0[%c3, %c0_13] : memref<4x256xf32, #tpu.memory_space<vmem>>, vector<1x256xf32>
    %c0_14 = arith.constant 0 : index
    %c0_15 = arith.constant 0 : index
    %41 = vector.load %arg2[%c0_14, %c0_15] : memref<32x8xf32, #tpu.memory_space<vmem>>, vector<16x1xf32>
    %c0_16 = arith.constant 0 : index
    %c1_17 = arith.constant 1 : index
    %42 = vector.load %arg2[%c0_16, %c1_17] : memref<32x8xf32, #tpu.memory_space<vmem>>, vector<16x1xf32>
    %c0_18 = arith.constant 0 : index
    %c2_19 = arith.constant 2 : index
    %43 = vector.load %arg2[%c0_18, %c2_19] : memref<32x8xf32, #tpu.memory_space<vmem>>, vector<16x1xf32>
    %c0_20 = arith.constant 0 : index
    %c3_21 = arith.constant 3 : index
    %44 = vector.load %arg2[%c0_20, %c3_21] : memref<32x8xf32, #tpu.memory_space<vmem>>, vector<16x1xf32>
    %c0_22 = arith.constant 0 : index
    %c4 = arith.constant 4 : index
    %45 = vector.load %arg2[%c0_22, %c4] : memref<32x8xf32, #tpu.memory_space<vmem>>, vector<32x1xf32>
    %c0_23 = arith.constant 0 : index
    %c5 = arith.constant 5 : index
    %46 = vector.load %arg2[%c0_23, %c5] : memref<32x8xf32, #tpu.memory_space<vmem>>, vector<32x1xf32>
    %c0_24 = arith.constant 0 : index
    %c6 = arith.constant 6 : index
    %47 = vector.load %arg2[%c0_24, %c6] : memref<32x8xf32, #tpu.memory_space<vmem>>, vector<1x1xf32>
    %48 = vector.broadcast %41 : vector<16x1xf32> to vector<16x256xf32>
    %49 = vector.broadcast %40 : vector<1x256xf32> to vector<16x256xf32>
    %50 = arith.mulf %48, %49 : vector<16x256xf32>
    %c1_i32_25 = arith.constant 1 : i32
    %51 = tpu.dynamic_rotate %50 by %c1_i32_25 dim 1 : vector<16x256xf32>, i32 -> vector<16x256xf32>
    %cst = arith.constant 0.000000e+00 : f32
    %52 = vector.shape_cast %18 : vector<1x256xi1> to vector<1x256xi1>
    %53 = vector.broadcast %52 : vector<1x256xi1> to vector<16x256xi1>
    %54 = vector.broadcast %cst : f32 to vector<16x256xf32>
    %55 = arith.select %53, %54, %51 : vector<16x256xi1>, vector<16x256xf32>
    %56 = vector.broadcast %42 : vector<16x1xf32> to vector<16x256xf32>
    %57 = vector.broadcast %37 : vector<1x256xf32> to vector<16x256xf32>
    %58 = arith.mulf %56, %57 : vector<16x256xf32>
    %59 = arith.addf %55, %58 : vector<16x256xf32>
    %60 = vector.broadcast %43 : vector<16x1xf32> to vector<16x256xf32>
    %61 = vector.broadcast %38 : vector<1x256xf32> to vector<16x256xf32>
    %62 = arith.mulf %60, %61 : vector<16x256xf32>
    %63 = arith.addf %59, %62 : vector<16x256xf32>
    %64 = vector.broadcast %44 : vector<16x1xf32> to vector<16x256xf32>
    %65 = arith.addf %63, %64 : vector<16x256xf32>
    %cst_26 = arith.constant 0.000000e+00 : f32
    %66 = vector.broadcast %cst_26 : f32 to vector<16x256xf32>
    %67 = arith.maximumf %65, %66 : vector<16x256xf32>
    %68 = vector.broadcast %41 : vector<16x1xf32> to vector<16x256xf32>
    %69 = vector.broadcast %38 : vector<1x256xf32> to vector<16x256xf32>
    %70 = arith.mulf %68, %69 : vector<16x256xf32>
    %71 = vector.broadcast %42 : vector<16x1xf32> to vector<16x256xf32>
    %72 = vector.broadcast %39 : vector<1x256xf32> to vector<16x256xf32>
    %73 = arith.mulf %71, %72 : vector<16x256xf32>
    %74 = arith.addf %70, %73 : vector<16x256xf32>
    %75 = vector.broadcast %43 : vector<16x1xf32> to vector<16x256xf32>
    %76 = vector.broadcast %40 : vector<1x256xf32> to vector<16x256xf32>
    %77 = arith.mulf %75, %76 : vector<16x256xf32>
    %78 = arith.addf %74, %77 : vector<16x256xf32>
    %79 = vector.broadcast %44 : vector<16x1xf32> to vector<16x256xf32>
    %80 = arith.addf %78, %79 : vector<16x256xf32>
    %cst_27 = arith.constant 0.000000e+00 : f32
    %81 = vector.broadcast %cst_27 : f32 to vector<16x256xf32>
    %82 = arith.maximumf %80, %81 : vector<16x256xf32>
    %c1_i32_28 = arith.constant 1 : i32
    %83 = tpu.dynamic_rotate %82 by %c1_i32_28 dim 1 : vector<16x256xf32>, i32 -> vector<16x256xf32>
    %cst_29 = arith.constant 0.000000e+00 : f32
    %84 = vector.shape_cast %18 : vector<1x256xi1> to vector<1x256xi1>
    %85 = vector.broadcast %84 : vector<1x256xi1> to vector<16x256xi1>
    %86 = vector.broadcast %cst_29 : f32 to vector<16x256xf32>
    %87 = arith.select %85, %86, %83 : vector<16x256xi1>, vector<16x256xf32>
    %88 = tpu.concatenate %87, %67, %82 in 0 : vector<16x256xf32>, vector<16x256xf32>, vector<16x256xf32> -> vector<48x256xf32>
    %c0_30 = arith.constant 0 : index
    %c0_31 = arith.constant 0 : index
    %89 = vector.load %arg1[%c0_30, %c0_31] : memref<68x64xf32, #tpu.memory_space<vmem>>, vector<32x48xf32>
    %cst_32 = arith.constant dense<0.000000e+00> : vector<32x256xf32>
    %90 = tpu.matmul %89, %88, %cst_32 {dimension_numbers = #tpu.dot_dimension_numbers<[1], [0], [0], [1], [0, 0, 1, 1], [], []>} : vector<32x48xf32>, vector<48x256xf32>, vector<32x256xf32> -> vector<32x256xf32>
    %91 = vector.broadcast %45 : vector<32x1xf32> to vector<32x256xf32>
    %92 = arith.addf %90, %91 : vector<32x256xf32>
    %cst_33 = arith.constant 0.000000e+00 : f32
    %93 = vector.broadcast %cst_33 : f32 to vector<32x256xf32>
    %94 = arith.maximumf %92, %93 : vector<32x256xf32>
    %c255_i32 = arith.constant 255 : i32
    %95 = tpu.dynamic_rotate %94 by %c255_i32 dim 1 : vector<32x256xf32>, i32 -> vector<32x256xf32>
    %cst_34 = arith.constant 0.000000e+00 : f32
    %96 = vector.shape_cast %36 : vector<1x256xi1> to vector<1x256xi1>
    %97 = vector.broadcast %96 : vector<1x256xi1> to vector<32x256xi1>
    %98 = vector.broadcast %cst_34 : f32 to vector<32x256xf32>
    %99 = arith.select %97, %98, %95 : vector<32x256xi1>, vector<32x256xf32>
    %100 = tpu.concatenate %94, %99 in 0 : vector<32x256xf32>, vector<32x256xf32> -> vector<64x256xf32>
    %c32 = arith.constant 32 : index
    %c0_35 = arith.constant 0 : index
    %101 = vector.load %arg1[%c32, %c0_35] : memref<68x64xf32, #tpu.memory_space<vmem>>, vector<32x64xf32>
    %cst_36 = arith.constant dense<0.000000e+00> : vector<32x256xf32>
    %102 = tpu.matmul %101, %100, %cst_36 {dimension_numbers = #tpu.dot_dimension_numbers<[1], [0], [0], [1], [0, 0, 1, 1], [], []>} : vector<32x64xf32>, vector<64x256xf32>, vector<32x256xf32> -> vector<32x256xf32>
    %103 = vector.broadcast %46 : vector<32x1xf32> to vector<32x256xf32>
    %104 = arith.addf %102, %103 : vector<32x256xf32>
    %cst_37 = arith.constant 0.000000e+00 : f32
    %105 = vector.broadcast %cst_37 : f32 to vector<32x256xf32>
    %106 = arith.maximumf %104, %105 : vector<32x256xf32>
    %107 = vector.extract_strided_slice %106 {offsets = [0, 0], sizes = [16, 256], strides = [1, 1]} : vector<32x256xf32> to vector<16x256xf32>
    %c255_i32_38 = arith.constant 255 : i32
    %108 = tpu.dynamic_rotate %107 by %c255_i32_38 dim 1 : vector<16x256xf32>, i32 -> vector<16x256xf32>
    %cst_39 = arith.constant 0.000000e+00 : f32
    %109 = vector.shape_cast %36 : vector<1x256xi1> to vector<1x256xi1>
    %110 = vector.broadcast %109 : vector<1x256xi1> to vector<16x256xi1>
    %111 = vector.broadcast %cst_39 : f32 to vector<16x256xf32>
    %112 = arith.select %110, %111, %108 : vector<16x256xi1>, vector<16x256xf32>
    %113 = tpu.concatenate %106, %112 in 0 : vector<32x256xf32>, vector<16x256xf32> -> vector<48x256xf32>
    %c64 = arith.constant 64 : index
    %c0_40 = arith.constant 0 : index
    %114 = vector.load %arg1[%c64, %c0_40] : memref<68x64xf32, #tpu.memory_space<vmem>>, vector<4x48xf32>
    %cst_41 = arith.constant dense<0.000000e+00> : vector<4x256xf32>
    %115 = tpu.matmul %114, %113, %cst_41 {dimension_numbers = #tpu.dot_dimension_numbers<[1], [0], [0], [1], [0, 0, 1, 1], [], []>} : vector<4x48xf32>, vector<48x256xf32>, vector<4x256xf32> -> vector<4x256xf32>
    %116 = vector.broadcast %47 : vector<1x1xf32> to vector<4x256xf32>
    %117 = arith.addf %115, %116 : vector<4x256xf32>
    %c0_42 = arith.constant 0 : index
    %c0_43 = arith.constant 0 : index
    %118 = vector.load %arg3[%c0_42, %c0_43] : memref<4x256xf32, #tpu.memory_space<vmem>>, vector<4x256xf32>
    tpu.vector_store %arg3[%c0_42, %c0_43], %117 {strides = array<i32>} : memref<4x256xf32, #tpu.memory_space<vmem>>, vector<4x256xf32>,
    return
  }
}

</mosaic_0001>

<llo_original>
// kernel: forward.1
$region0: #{forward.1}
  #allocation0 [shape = 'u32[]', space=smem, size = 0x4, offset = 0x4, fixed_abs, tag = 'smem constant byte address 0x4 - core index']
  #allocation1 [shape = 'u32[72,128]{1,0:T(1,128)}', space=vmem, size = 0x9000, scoped, tag = 'internal scratch']
  %s0 = inlined_call_operand.vmem [shape: f32[4,256], index: 0, kind: input, shape index: {}]
  %s1 = inlined_call_operand.vmem [shape: f32[68,64], index: 1, kind: input, shape index: {}]
  %s2 = inlined_call_operand.vmem [shape: f32[32,8], index: 2, kind: input, shape index: {}]
  %s3 = inlined_call_operand.vmem [shape: f32[4,256], index: 3, kind: output, shape index: {}]
  %s4 = sld [smem:[#allocation0]]
  $region22: #{forward.1} parent=0
    _
  %s6 = ssub.s32 1, %s4
  %s7 = scalar_select 0, %s6, %s4
  // Predicated region
  $region2: #{forward.1} parent=0 // pred_check
    _
  $region3: #{forward.1} parent=0 // pred_check_branch
    %9 = sbr.rel (0) target = $region5
  $region4: #{forward.1} parent=0 // pred_region
    _
  $region5: #{forward.1} parent=0 // pred_fallthru
    _
  // Predicated region
  $region6: #{forward.1} parent=0 // pred_check
    _
  $region7: #{forward.1} parent=0 // pred_check_branch
    %11 = sbr.rel (0) target = $region9
  $region8: #{forward.1} parent=0 // pred_region
    _
  $region9: #{forward.1} parent=0 // pred_fallthru
    _
  // Predicated region
  $region10: #{forward.1} parent=0 // pred_check
    _
  $region11: #{forward.1} parent=0 // pred_check_branch
    %13 = sbr.rel (0) target = $region13
  $region12: #{forward.1} parent=0 // pred_region
    _
  $region13: #{forward.1} parent=0 // pred_fallthru
    _
  %v14 = vlaneseq
  %v15 = vand.u32 %v14, 127
  %v16 = vadd.s32 %v15, 128
  %vm17 = vcmp.lt.s32.totalorder %v15, 0
  %v18 = vsub.s32 0, %v15
  %v19 = vsel %vm17, %v18, %v15
  %v20 = vshrl.u32 %v19, 7
  %v21 = vand.u32 %v19, 127
  %v22 = vsub.s32 0, %v21
  %v23 = vsel %vm17, %v22, %v21
  %vm24 = vcmp.lt.s32.totalorder %v16, 0
  %v25 = vsub.s32 0, %v16
  %v26 = vsel %vm24, %v25, %v16
  %v27 = vshrl.u32 %v26, 7
  %v28 = vand.u32 %v26, 127
  %v29 = vsub.s32 0, %v28
  %v30 = vsel %vm24, %v29, %v28
  %vm31 = vcmp.ne.s32.totalorder %v23, 0
  %vm32 = vcmp.ne.s32.totalorder %v30, 0
  %vm33 = vcmp.lt.s32.totalorder %v23, 0
  %vm34 = vcmp.lt.s32.totalorder %v30, 0
  %vm35 = vmand %vm33, %vm31
  %vm36 = vmand %vm34, %vm32
  %v37 = vadd.s32 %v23, 128
  %v38 = vadd.s32 %v30, 128
  %v39 = vsel %vm35, %v37, %v23
  %v40 = vsel %vm36, %v38, %v30
  %vm41 = vcmp.eq.s32.totalorder %v39, 0
  %vm42 = vcmp.eq.s32.totalorder %v40, 0
  %vm43 = vcmp.eq.s32.totalorder %v39, 127
  %vm44 = vcmp.eq.s32.totalorder %v40, 127
  %v45 = vld [vmem:[%s0] ss:$4 sm:$0x3]
  %s46 = scalar_lea.vmem %s0, 1
  %v47 = vld [vmem:[%s46] ss:$4 sm:$0x3]
  %s48 = scalar_lea.vmem %s0, 2
  %v49 = vld [vmem:[%s48] ss:$4 sm:$0x3]
  %s50 = scalar_lea.vmem %s0, 3
  %v51 = vld [vmem:[%s50] ss:$4 sm:$0x3]
  %v52 = vld [vmem:[%s2] sm:$0xff]
  %v53 = vld [vmem:[%s2 + $0x8] sm:$0xff]
  %v54 = vld [vmem:[%s2 + $0x10] sm:$0xff]
  %v55 = vld [vmem:[%s2 + $0x18] sm:$0xff]
  %v56 = vld [vmem:[%s2] sm:$0x1]
  %58 = vset.pattern.permute.xlu0 0
  %59 = vperm.xlu0 %58, %v52
  %v60 = vpop.permute.xlu0 %59
  %63 = vset.pattern.permute.xlu0 0
  %64 = vperm.xlu0 %63, %v53
  %v65 = vpop.permute.xlu0 %64
  %v68 = vperm.slane %v51, 0
  %v69 = vperm.slane %v51, 1
  %v72 = vmul.f32 %v60, %v68
  %v73 = vmul.f32 %v60, %v69
  %v74 = vmul.f32 %v65, %v68
  %v75 = vmul.f32 %v65, %v69
  %76 = vrot.lane.b32.xlu0 %v72, 1
  %v77 = vpop.permute.xlu0 %76
  %78 = vrot.lane.b32.xlu0 %v74, 1
  %v79 = vpop.permute.xlu0 %78
  %80 = vrot.lane.b32.xlu0 %v73, 1
  %v81 = vpop.permute.xlu0 %80
  %82 = vrot.lane.b32.xlu0 %v75, 1
  %v83 = vpop.permute.xlu0 %82
  %vm84 = vcmp.lt.s32.totalorder %v15, 1
  %v85 = vsel %vm84, %v77, %v81
  %v86 = vsel %vm84, %v79, %v83
  %v87 = vsel %vm84, %v81, %v77
  %v88 = vsel %vm84, %v83, %v79
  %v89 = vsel %vm41, 1, 0
  %v90 = vsel %vm42, 1, 0
  %vm91 = vcmp.eq.s32.totalorder %v89, 1
  %vm92 = vcmp.eq.s32.totalorder %v90, 1
  %v93 = vsel %vm91, 0.0, %v87
  %v94 = vsel %vm92, 0.0, %v85
  %v95 = vsel %vm91, 0.0, %v88
  %v96 = vsel %vm92, 0.0, %v86
  %97 = vset.pattern.permute.xlu0 1
  %98 = vperm.xlu0 %97, %v52
  %v99 = vpop.permute.xlu0 %98
  %101 = vset.pattern.permute.xlu0 1
  %102 = vperm.xlu0 %101, %v53
  %v103 = vpop.permute.xlu0 %102
  %v106 = vperm.slane %v45, 0
  %v107 = vperm.slane %v45, 1
  %v110 = vmul.f32 %v99, %v106
  %v111 = vmul.f32 %v99, %v107
  %v112 = vmul.f32 %v103, %v106
  %v113 = vmul.f32 %v103, %v107
  %v114 = vadd.f32 %v93, %v110
  %v115 = vadd.f32 %v94, %v111
  %v116 = vadd.f32 %v95, %v112
  %v117 = vadd.f32 %v96, %v113
  %118 = vset.pattern.permute.xlu0 2
  %119 = vperm.xlu0 %118, %v52
  %v120 = vpop.permute.xlu0 %119
  %122 = vset.pattern.permute.xlu0 2
  %123 = vperm.xlu0 %122, %v53
  %v124 = vpop.permute.xlu0 %123
  %v127 = vperm.slane %v47, 0
  %v128 = vperm.slane %v47, 1
  %v131 = vmul.f32 %v120, %v127
  %v132 = vmul.f32 %v120, %v128
  %v133 = vmul.f32 %v124, %v127
  %v134 = vmul.f32 %v124, %v128
  %v135 = vadd.f32 %v114, %v131
  %v136 = vadd.f32 %v115, %v132
  %v137 = vadd.f32 %v116, %v133
  %v138 = vadd.f32 %v117, %v134
  %139 = vset.pattern.permute.xlu0 3
  %140 = vperm.xlu0 %139, %v52
  %v141 = vpop.permute.xlu0 %140
  %143 = vset.pattern.permute.xlu0 3
  %144 = vperm.xlu0 %143, %v53
  %v145 = vpop.permute.xlu0 %144
  %v147 = vadd.f32 %v135, %v141
  %v148 = vadd.f32 %v136, %v141
  %v149 = vadd.f32 %v137, %v145
  %v150 = vadd.f32 %v138, %v145
  %v151 = vmax.f32 %v147, 0.0
  %v152 = vmax.f32 %v148, 0.0
  %v153 = vmax.f32 %v149, 0.0
  %v154 = vmax.f32 %v150, 0.0
  %v155 = vmul.f32 %v60, %v127
  %v156 = vmul.f32 %v60, %v128
  %v157 = vmul.f32 %v65, %v127
  %v158 = vmul.f32 %v65, %v128
  %v160 = vperm.slane %v49, 0
  %v161 = vperm.slane %v49, 1
  %v164 = vmul.f32 %v99, %v160
  %v165 = vmul.f32 %v99, %v161
  %v166 = vmul.f32 %v103, %v160
  %v167 = vmul.f32 %v103, %v161
  %v168 = vadd.f32 %v155, %v164
  %v169 = vadd.f32 %v156, %v165
  %v170 = vadd.f32 %v157, %v166
  %v171 = vadd.f32 %v158, %v167
  %v172 = vmul.f32 %v120, %v68
  %v173 = vmul.f32 %v120, %v69
  %v174 = vmul.f32 %v124, %v68
  %v175 = vmul.f32 %v124, %v69
  %v176 = vadd.f32 %v168, %v172
  %v177 = vadd.f32 %v169, %v173
  %v178 = vadd.f32 %v170, %v174
  %v179 = vadd.f32 %v171, %v175
  %v180 = vadd.f32 %v176, %v141
  %v181 = vadd.f32 %v177, %v141
  %v182 = vadd.f32 %v178, %v145
  %v183 = vadd.f32 %v179, %v145
  %v184 = vmax.f32 %v180, 0.0
  %v185 = vmax.f32 %v181, 0.0
  %v186 = vmax.f32 %v182, 0.0
  %v187 = vmax.f32 %v183, 0.0
  %188 = vrot.lane.b32.xlu0 %v184, 1
  %v189 = vpop.permute.xlu0 %188
  %190 = vrot.lane.b32.xlu0 %v186, 1
  %v191 = vpop.permute.xlu0 %190
  %192 = vrot.lane.b32.xlu0 %v185, 1
  %v193 = vpop.permute.xlu0 %192
  %194 = vrot.lane.b32.xlu0 %v187, 1
  %v195 = vpop.permute.xlu0 %194
  %v196 = vsel %vm84, %v189, %v193
  %v197 = vsel %vm84, %v191, %v195
  %v198 = vsel %vm84, %v193, %v189
  %v199 = vsel %vm84, %v195, %v191
  %v200 = vsel %vm91, 0.0, %v198
  %v201 = vsel %vm92, 0.0, %v196
  %v202 = vsel %vm91, 0.0, %v199
  %v203 = vsel %vm92, 0.0, %v197
  %v204 = vld [vmem:[%s1] sm:$0xff]
  %v205 = vld [vmem:[%s1 + $0x8] sm:$0xff]
  %v206 = vld [vmem:[%s1 + $0x10] sm:$0xff]
  %v207 = vld [vmem:[%s1 + $0x18] sm:$0xff]
  %208 = vset.pattern.permute.xlu0 4
  %209 = vperm.xlu0 %208, %v52
  %v210 = vpop.permute.xlu0 %209
  %212 = vset.pattern.permute.xlu0 4
  %213 = vperm.xlu0 %212, %v53
  %v214 = vpop.permute.xlu0 %213
  %217 = vset.pattern.permute.xlu0 4
  %218 = vperm.xlu0 %217, %v54
  %v219 = vpop.permute.xlu0 %218
  %222 = vset.pattern.permute.xlu0 4
  %223 = vperm.xlu0 %222, %v55
  %v224 = vpop.permute.xlu0 %223
  %vm226 = vcmask 392192
  %v228 = vsel %vm226, %v204, 0
  %v231 = vsel %vm226, %v205, 0
  %v234 = vsel %vm226, %v206, 0
  %v237 = vsel %vm226, %v207, 0
  %239 = vmatpush.msra.mxu0 0.0
  %240 = vmatpush.msra.mxu0 0.0
  %241 = vmatpush.msra.mxu0 0.0
  %242 = vmatpush.msra.mxu0 0.0
  %243 = vmatpush.msra.mxu0 0.0
  %244 = vmatpush.msra.mxu0 0.0
  %245 = vmatpush.msra.mxu0 0.0
  %246 = vmatpush.msra.mxu0 0.0
  %247 = vmatpush.msra.mxu0 0.0
  %248 = vmatpush.msra.mxu0 0.0
  %249 = vmatpush.msra.mxu0 %v186
  %250 = vmatpush.msra.mxu0 %v184
  %251 = vmatpush.msra.mxu0 %v153
  %252 = vmatpush.msra.mxu0 %v151
  %253 = vmatpush.msra.mxu0 %v202
  %254 = vmatpush.msra.mxu0 %v200
  %255 = vmatmul.f32.gmra.mxu0 %v228
  %v256 = vpop.f32.mrf.mxu0
  %v257 = vadd.f32 %v210, %v256
  %258 = vmatmul.f32.gmra.mxu0 %v231
  %v259 = vpop.f32.mrf.mxu0
  %v260 = vadd.f32 %v214, %v259
  %261 = vmatmul.f32.gmra.mxu0 %v234
  %v262 = vpop.f32.mrf.mxu0
  %v263 = vadd.f32 %v219, %v262
  %264 = vmatmul.f32.gmra.mxu0 %v237
  %v265 = vpop.f32.mrf.mxu0
  %v266 = vadd.f32 %v224, %v265
  %267 = vdwg.mxu0
  %268 = vmatpush.msra.mxu0 0.0
  %269 = vmatpush.msra.mxu0 0.0
  %270 = vmatpush.msra.mxu0 0.0
  %271 = vmatpush.msra.mxu0 0.0
  %272 = vmatpush.msra.mxu0 0.0
  %273 = vmatpush.msra.mxu0 0.0
  %274 = vmatpush.msra.mxu0 0.0
  %275 = vmatpush.msra.mxu0 0.0
  %276 = vmatpush.msra.mxu0 0.0
  %277 = vmatpush.msra.mxu0 0.0
  %278 = vmatpush.msra.mxu0 %v187
  %279 = vmatpush.msra.mxu0 %v185
  %280 = vmatpush.msra.mxu0 %v154
  %281 = vmatpush.msra.mxu0 %v152
  %282 = vmatpush.msra.mxu0 %v203
  %283 = vmatpush.msra.mxu0 %v201
  %284 = vmatmul.f32.gmra.mxu0 %v228
  %v285 = vpop.f32.mrf.mxu0
  %v286 = vadd.f32 %v210, %v285
  %287 = vmatmul.f32.gmra.mxu0 %v231
  %v288 = vpop.f32.mrf.mxu0
  %v289 = vadd.f32 %v214, %v288
  %290 = vmatmul.f32.gmra.mxu0 %v234
  %v291 = vpop.f32.mrf.mxu0
  %v292 = vadd.f32 %v219, %v291
  %293 = vmatmul.f32.gmra.mxu0 %v237
  %v294 = vpop.f32.mrf.mxu0
  %v295 = vadd.f32 %v224, %v294
  %296 = vdwg.mxu0
  %v297 = vmax.f32 %v257, 0.0
  %v298 = vmax.f32 %v286, 0.0
  %v299 = vmax.f32 %v260, 0.0
  %v300 = vmax.f32 %v289, 0.0
  %v301 = vmax.f32 %v263, 0.0
  %v302 = vmax.f32 %v292, 0.0
  %v303 = vmax.f32 %v266, 0.0
  %v304 = vmax.f32 %v295, 0.0
  %305 = vrot.lane.b32.xlu0 %v297, 127
  %v306 = vpop.permute.xlu0 %305
  %307 = vrot.lane.b32.xlu0 %v299, 127
  %v308 = vpop.permute.xlu0 %307
  %309 = vrot.lane.b32.xlu0 %v301, 127
  %v310 = vpop.permute.xlu0 %309
  %311 = vrot.lane.b32.xlu0 %v303, 127
  %v312 = vpop.permute.xlu0 %311
  %313 = vrot.lane.b32.xlu0 %v298, 127
  %v314 = vpop.permute.xlu0 %313
  %315 = vrot.lane.b32.xlu0 %v300, 127
  %v316 = vpop.permute.xlu0 %315
  %317 = vrot.lane.b32.xlu0 %v302, 127
  %v318 = vpop.permute.xlu0 %317
  %319 = vrot.lane.b32.xlu0 %v304, 127
  %v320 = vpop.permute.xlu0 %319
  %vm321 = vcmp.lt.s32.totalorder %v15, 127
  %v322 = vsel %vm321, %v306, %v314
  %v323 = vsel %vm321, %v308, %v316
  %v324 = vsel %vm321, %v310, %v318
  %v325 = vsel %vm321, %v312, %v320
  %v326 = vsel %vm321, %v314, %v306
  %v327 = vsel %vm321, %v316, %v308
  %v328 = vsel %vm321, %v318, %v310
  %v329 = vsel %vm321, %v320, %v312
  %v330 = vsel %vm43, 1, 0
  %v331 = vsel %vm44, 1, 0
  %vm332 = vcmp.eq.s32.totalorder %v330, 1
  %vm333 = vcmp.eq.s32.totalorder %v331, 1
  %v334 = vsel %vm332, 0.0, %v322
  %v335 = vsel %vm333, 0.0, %v326
  %v336 = vsel %vm332, 0.0, %v323
  %v337 = vsel %vm333, 0.0, %v327
  %v338 = vsel %vm332, 0.0, %v324
  %v339 = vsel %vm333, 0.0, %v328
  %v340 = vsel %vm332, 0.0, %v325
  %v341 = vsel %vm333, 0.0, %v329
  %v342 = vld [vmem:[%s1 + $0x20] sm:$0xff]
  %v343 = vld [vmem:[%s1 + $0x28] sm:$0xff]
  %v344 = vld [vmem:[%s1 + $0x30] sm:$0xff]
  %v345 = vld [vmem:[%s1 + $0x38] sm:$0xff]
  %346 = vset.pattern.permute.xlu0 5
  %347 = vperm.xlu0 %346, %v52
  %v348 = vpop.permute.xlu0 %347
  %350 = vset.pattern.permute.xlu0 5
  %351 = vperm.xlu0 %350, %v53
  %v352 = vpop.permute.xlu0 %351
  %354 = vset.pattern.permute.xlu0 5
  %355 = vperm.xlu0 %354, %v54
  %v356 = vpop.permute.xlu0 %355
  %358 = vset.pattern.permute.xlu0 5
  %359 = vperm.xlu0 %358, %v55
  %v360 = vpop.permute.xlu0 %359
  %vm362 = vcmask 523264
  %v364 = vsel %vm362, %v342, 0
  %v367 = vsel %vm362, %v343, 0
  %v370 = vsel %vm362, %v344, 0
  %v373 = vsel %vm362, %v345, 0
  %375 = vmatpush.msra.mxu0 0.0
  %376 = vmatpush.msra.mxu0 0.0
  %377 = vmatpush.msra.mxu0 0.0
  %378 = vmatpush.msra.mxu0 0.0
  %379 = vmatpush.msra.mxu0 0.0
  %380 = vmatpush.msra.mxu0 0.0
  %381 = vmatpush.msra.mxu0 0.0
  %382 = vmatpush.msra.mxu0 0.0
  %383 = vmatpush.msra.mxu0 %v340
  %384 = vmatpush.msra.mxu0 %v338
  %385 = vmatpush.msra.mxu0 %v336
  %386 = vmatpush.msra.mxu0 %v334
  %387 = vmatpush.msra.mxu0 %v303
  %388 = vmatpush.msra.mxu0 %v301
  %389 = vmatpush.msra.mxu0 %v299
  %390 = vmatpush.msra.mxu0 %v297
  %391 = vmatmul.f32.gmra.mxu0 %v364
  %v392 = vpop.f32.mrf.mxu0
  %v393 = vadd.f32 %v348, %v392
  %394 = vmatmul.f32.gmra.mxu0 %v367
  %v395 = vpop.f32.mrf.mxu0
  %v396 = vadd.f32 %v352, %v395
  %397 = vmatmul.f32.gmra.mxu0 %v370
  %v398 = vpop.f32.mrf.mxu0
  %v399 = vadd.f32 %v356, %v398
  %400 = vmatmul.f32.gmra.mxu0 %v373
  %v401 = vpop.f32.mrf.mxu0
  %v402 = vadd.f32 %v360, %v401
  %403 = vdwg.mxu0
  %404 = vmatpush.msra.mxu0 0.0
  %405 = vmatpush.msra.mxu0 0.0
  %406 = vmatpush.msra.mxu0 0.0
  %407 = vmatpush.msra.mxu0 0.0
  %408 = vmatpush.msra.mxu0 0.0
  %409 = vmatpush.msra.mxu0 0.0
  %410 = vmatpush.msra.mxu0 0.0
  %411 = vmatpush.msra.mxu0 0.0
  %412 = vmatpush.msra.mxu0 %v341
  %413 = vmatpush.msra.mxu0 %v339
  %414 = vmatpush.msra.mxu0 %v337
  %415 = vmatpush.msra.mxu0 %v335
  %416 = vmatpush.msra.mxu0 %v304
  %417 = vmatpush.msra.mxu0 %v302
  %418 = vmatpush.msra.mxu0 %v300
  %419 = vmatpush.msra.mxu0 %v298
  %420 = vmatmul.f32.gmra.mxu0 %v364
  %v421 = vpop.f32.mrf.mxu0
  %v422 = vadd.f32 %v348, %v421
  %423 = vmatmul.f32.gmra.mxu0 %v367
  %v424 = vpop.f32.mrf.mxu0
  %v425 = vadd.f32 %v352, %v424
  %426 = vmatmul.f32.gmra.mxu0 %v370
  %v427 = vpop.f32.mrf.mxu0
  %v428 = vadd.f32 %v356, %v427
  %429 = vmatmul.f32.gmra.mxu0 %v373
  %v430 = vpop.f32.mrf.mxu0
  %v431 = vadd.f32 %v360, %v430
  %432 = vdwg.mxu0
  %v433 = vmax.f32 %v393, 0.0
  %v434 = vmax.f32 %v422, 0.0
  %v435 = vmax.f32 %v396, 0.0
  %v436 = vmax.f32 %v425, 0.0
  %v437 = vmax.f32 %v399, 0.0
  %v438 = vmax.f32 %v428, 0.0
  %v439 = vmax.f32 %v402, 0.0
  %v440 = vmax.f32 %v431, 0.0
  %441 = vrot.lane.b32.xlu0 %v433, 127
  %v442 = vpop.permute.xlu0 %441
  %443 = vrot.lane.b32.xlu0 %v435, 127
  %v444 = vpop.permute.xlu0 %443
  %445 = vrot.lane.b32.xlu0 %v434, 127
  %v446 = vpop.permute.xlu0 %445
  %447 = vrot.lane.b32.xlu0 %v436, 127
  %v448 = vpop.permute.xlu0 %447
  %v449 = vsel %vm321, %v442, %v446
  %v450 = vsel %vm321, %v444, %v448
  %v451 = vsel %vm321, %v446, %v442
  %v452 = vsel %vm321, %v448, %v444
  %v453 = vsel %vm332, 0.0, %v449
  %v454 = vsel %vm333, 0.0, %v451
  %v455 = vsel %vm332, 0.0, %v450
  %v456 = vsel %vm333, 0.0, %v452
  %v457 = vld [vmem:[%s1 + $0x40] sm:$0xf]
  %459 = vrot.lane.b32.xlu0 %v56, 122
  %v460 = vpop.permute.xlu0 %459
  %s461 = vtos %v460
  %v462 = vstv %s461
  %v465 = vsel %vm226, %v457, 0
  %467 = vmatpush.msra.mxu0 0.0
  %468 = vmatpush.msra.mxu0 0.0
  %469 = vmatpush.msra.mxu0 0.0
  %470 = vmatpush.msra.mxu0 0.0
  %471 = vmatpush.msra.mxu0 0.0
  %472 = vmatpush.msra.mxu0 0.0
  %473 = vmatpush.msra.mxu0 0.0
  %474 = vmatpush.msra.mxu0 0.0
  %475 = vmatpush.msra.mxu0 0.0
  %476 = vmatpush.msra.mxu0 0.0
  %477 = vmatpush.msra.mxu0 %v455
  %478 = vmatpush.msra.mxu0 %v453
  %479 = vmatpush.msra.mxu0 %v439
  %480 = vmatpush.msra.mxu0 %v437
  %481 = vmatpush.msra.mxu0 %v435
  %482 = vmatpush.msra.mxu0 %v433
  %483 = vmatmul.f32.gmra.mxu0 %v465
  %v484 = vpop.f32.mrf.mxu0
  %v485 = vadd.f32 %v462, %v484
  %486 = vdwg.mxu0
  %487 = vmatpush.msra.mxu0 0.0
  %488 = vmatpush.msra.mxu0 0.0
  %489 = vmatpush.msra.mxu0 0.0
  %490 = vmatpush.msra.mxu0 0.0
  %491 = vmatpush.msra.mxu0 0.0
  %492 = vmatpush.msra.mxu0 0.0
  %493 = vmatpush.msra.mxu0 0.0
  %494 = vmatpush.msra.mxu0 0.0
  %495 = vmatpush.msra.mxu0 0.0
  %496 = vmatpush.msra.mxu0 0.0
  %497 = vmatpush.msra.mxu0 %v456
  %498 = vmatpush.msra.mxu0 %v454
  %499 = vmatpush.msra.mxu0 %v440
  %500 = vmatpush.msra.mxu0 %v438
  %501 = vmatpush.msra.mxu0 %v436
  %502 = vmatpush.msra.mxu0 %v434
  %503 = vmatmul.f32.gmra.mxu0 %v465
  %v504 = vpop.f32.mrf.mxu0
  %v505 = vadd.f32 %v462, %v504
  %506 = vdwg.mxu0
  %v509 = vrot.slane %v505, 4
  %vm510 = vcmask 1043456
  %v511 = vsel %vm510, %v485, %v509
  %513 = vst [vmem:[%s3] sm:$0xff] %v511
  // Predicated region
  $region14: #{forward.1} parent=0 // pred_check
    _
  $region15: #{forward.1} parent=0 // pred_check_branch
    %515 = sbr.rel (0) target = $region17
  $region16: #{forward.1} parent=0 // pred_region
    _
  $region17: #{forward.1} parent=0 // pred_fallthru
    _
  // Predicated region
  $region18: #{forward.1} parent=0 // pred_check
    _
  $region19: #{forward.1} parent=0 // pred_check_branch
    %517 = sbr.rel (0) target = $region21
  $region20: #{forward.1} parent=0 // pred_region
    _
  $region21: #{forward.1} parent=0 // pred_fallthru
    _

</llo_original>
